<compile_context>
chip_gen: v7x
topology: tpu7x:2x2x1
jax: 0.10.0
libtpu: 0.0.40
codegen_flags: <defaults>
</compile_context>

<pallas_src>
import functools

import jax
import jax.numpy as jnp
from jax.experimental import pallas as pl
from jax.experimental.pallas import tpu as pltpu

NEG_SLOPE = 0.01  # torch.nn.LeakyReLU default negative_slope


def _conv_lrelu_kernel(x_ref, w_ref, b_ref, o_ref, *, H, W):
    # x_ref: (R, H*W)    R = images_per_step*Cin rows, one (image, channel)
    #                    plane per sublane row, pixels on the lane axis.
    # w_ref: (Q, 9*R)    Q = images_per_step*Cout; block-diagonal over images,
    #                    columns ordered (kh, kw, row).
    # b_ref: (Q, 1)      bias (tiled per image).
    # o_ref: (Q, H*W)    lane-dense output block.
    M = x_ref.shape[1]                                        # H * W
    x = x_ref[...]                                            # (R, M)

    # Edge masks once at (1, M); jnp.where broadcasts them over all rows.
    lane = jax.lax.broadcasted_iota(jnp.int32, (1, M), 1)     # y*W + x per pixel
    col = lane % W
    first_row = lane < W
    last_row = lane >= (H - 1) * W
    first_col = col == 0
    last_col = col == W - 1

    # Vertical neighbours with replicate padding: roll every row by +/- W lanes
    # (XLU) and keep the unshifted edge row where it would wrap.
    up = jnp.where(first_row, x, pltpu.roll(x, shift=W, axis=1))           # y-1
    dn = jnp.where(last_row, x, pltpu.roll(x, shift=(M - W) % M, axis=1))  # y+1

    # Build the im2col RHS entirely in vregs: 9 taps, each a full (R, M)
    # 8-sublane-aligned slab, concatenated along the contraction axis.
    taps = []
    for v in (up, x, dn):                                     # kh = 0, 1, 2
        left = jnp.where(first_col, v, pltpu.roll(v, shift=1, axis=1))      # x-1
        right = jnp.where(last_col, v, pltpu.roll(v, shift=M - 1, axis=1))  # x+1
        taps += [left, v, right]                              # kw = 0, 1, 2
    rhs = jnp.concatenate(taps, axis=0)                       # (9*R, M)

    # Single fused im2col matmul on the MXU, f32 accumulation.
    acc = jnp.dot(w_ref[...], rhs, preferred_element_type=jnp.float32)  # (Q, M)
    acc = acc + b_ref[...]                                    # bias over lanes
    acc = jnp.maximum(acc, NEG_SLOPE * acc)                   # LeakyReLU(0.01)
    o_ref[...] = acc.astype(o_ref.dtype)                      # full unmasked store


def _tensorcores_per_chip():
    """Best-effort: 2 TensorCores per chip on v7x, 1 on v5e/v6e."""
    try:
        kind = jax.devices()[0].device_kind.lower().replace(" ", "")
    except Exception:
        return 1
    return 2 if ("v7" in kind or "7x" in kind) else 1


def _pick_images_per_step(N, Cin, Cout, requested=None):
    """Number of images folded into one grid step.

    The x/out blocks are (nb*Cin, H*W) / (nb*Cout, H*W); nb must either cover
    the whole batch or keep nb*Cin and nb*Cout multiples of 8 so every block
    and every tap slab stays 8-sublane aligned.
    """
    def ok(nb):
        return N % nb == 0 and (
            nb == N or ((nb * Cin) % 8 == 0 and (nb * Cout) % 8 == 0))

    if requested is not None:
        for nb in range(max(1, min(int(requested), N)), N + 1):
            if ok(nb):
                return nb
        return N
    if _tensorcores_per_chip() >= 2:
        # v7x: prefer >=2 "parallel" grid steps so both TensorCores get work.
        for nb in range(N // 2, 0, -1):
            if ok(nb):
                return nb
    # Single-TC chips (v5e/v6e): fold the whole batch -> one grid step, so this
    # tiny kernel pays its fixed per-step overhead exactly once.
    return N


def conv_lea_forward(x_nchw, w_oihw, bias, images_per_step=None):
    """conv3x3 (replicate pad 1, stride 1, bias) + LeakyReLU(0.01), NCHW in/out."""
    N, Cin, H, W = x_nchw.shape
    Cout = w_oihw.shape[0]
    M = H * W

    nb = _pick_images_per_step(N, Cin, Cout, images_per_step)
    R, Q = nb * Cin, nb * Cout

    # Free contiguous reshape: one (image, channel) plane per row, pixels on lanes.
    x_rows = x_nchw.reshape(N * Cin, M)

    # (Cout, Cin, kh, kw) -> (Cout, kh*kw, Cin), then block-diagonal over the nb
    # images of a grid step so ONE matmul handles them all without mixing them:
    #   w_blk[m*Cout + o, t*R + n*Cin + c] = w[o, c, t] * (m == n)
    w_t = jnp.transpose(w_oihw, (0, 2, 3, 1)).reshape(Cout, 9, Cin)
    eye = jnp.eye(nb, dtype=w_t.dtype)
    w_blk = jnp.einsum("mn,otc->motnc", eye, w_t).reshape(Q, 9 * R)
    b_blk = jnp.tile(bias, nb).reshape(Q, 1)

    kernel = functools.partial(_conv_lrelu_kernel, H=H, W=W)

    out_rows = pl.pallas_call(
        kernel,
        out_shape=jax.ShapeDtypeStruct((N * Cout, M), x_nchw.dtype),
        grid=(N // nb,),
        in_specs=[
            pl.BlockSpec((R, M), lambda g: (g, 0)),
            pl.BlockSpec((Q, 9 * R), lambda g: (0, 0)),
            pl.BlockSpec((Q, 1), lambda g: (0, 0)),
        ],
        out_specs=pl.BlockSpec((Q, M), lambda g: (g, 0)),
        compiler_params=pltpu.CompilerParams(dimension_semantics=("parallel",)),
    )(x_rows, w_blk, b_blk)

    return out_rows.reshape(N, Cout, H, W)   # free reshape back to NCHW


def _reference(x_nchw, w_oihw, bias):
    # Pure-JAX reference: edge-pad then VALID conv, + bias, LeakyReLU.
    xpad = jnp.pad(x_nchw, ((0, 0), (0, 0), (1, 1), (1, 1)), mode="edge")
    y = jax.lax.conv_general_dilated(
        xpad, w_oihw, window_strides=(1, 1), padding="VALID",
        dimension_numbers=("NCHW", "OIHW", "NCHW"),
        precision=jax.lax.Precision.HIGHEST,
    ) + bias.reshape(1, -1, 1, 1)
    return jnp.where(y >= 0, y, NEG_SLOPE * y)


if __name__ == "__main__":
    # Small shapes consistent with the module: batch=2, in_ch=4, out_ch=8, 16x16
    N, CIN, COUT, H, W = 2, 4, 8, 16, 16

    key = jax.random.PRNGKey(0)
    kx, kw, kb = jax.random.split(key, 3)

    x = jax.random.normal(kx, (N, CIN, H, W), dtype=jnp.float32)
    # nn.Conv2d(CIN, COUT, 3)-style synthetic parameters (OIHW weights + bias).
    fan_in = CIN * 3 * 3
    bound = 1.0 / (fan_in ** 0.5)
    w = jax.random.uniform(kw, (COUT, CIN, 3, 3), jnp.float32, -bound, bound)
    b = jax.random.uniform(kb, (COUT,), jnp.float32, -bound, bound)

    out = conv_lea_forward(x, w, b)
    out = jax.block_until_ready(out)

    ref = _reference(x, w, b)
    assert out.shape == (N, COUT, H, W)
    assert jnp.allclose(out, ref, atol=1e-5, rtol=1e-5), "mismatch vs reference"

    print("KERNEL_OK")
</pallas_src>

<mosaic_0001>
module attributes {stable_mosaic.version = 11 : i64} {
  func.func @_conv_lrelu_kernel(%arg0: i32, %arg1: memref<8x256xf32, #tpu.memory_space<vmem>>, %arg2: memref<16x72xf32, #tpu.memory_space<vmem>>, %arg3: memref<16x1xf32, #tpu.memory_space<vmem>>, %arg4: memref<16x256xf32, #tpu.memory_space<vmem>>) attributes {dimension_semantics = [#tpu.dimension_semantics<parallel>], iteration_bounds = array<i64: 1>, scalar_prefetch = 0 : i64, scratch_operands = 0 : i64, tpu.core_type = #tpu.core_type<tc>, window_params = [{transform_indices = @transform_0, window_bounds = array<i64: 8, 256>}, {pipeline_mode = #tpu.pipeline_mode<synchronous>, transform_indices = @transform_1, window_bounds = array<i64: 16, 72>}, {pipeline_mode = #tpu.pipeline_mode<synchronous>, transform_indices = @transform_2, window_bounds = array<i64: 16, 1>}, {transform_indices = @transform_3, window_bounds = array<i64: 16, 256>}]} {
    %c0 = arith.constant 0 : index
    %c0_0 = arith.constant 0 : index
    %0 = vector.load %arg1[%c0, %c0_0] : memref<8x256xf32, #tpu.memory_space<vmem>>, vector<8x256xf32>
    %1 = tpu.iota {dimensions = array<i32: 1>} : vector<1x256xi32>
    %c16_i32 = arith.constant 16 : i32
    %c0_i32 = arith.constant 0 : i32
    %2 = arith.cmpi eq, %c16_i32, %c0_i32 : i32
    %c1_i32 = arith.constant 1 : i32
    %3 = arith.select %2, %c1_i32, %c16_i32 : i32
    %4 = vector.broadcast %3 : i32 to vector<1x256xi32>
    %5 = arith.remsi %1, %4 : vector<1x256xi32>
    %c0_i32_1 = arith.constant 0 : i32
    %6 = vector.broadcast %c0_i32_1 : i32 to vector<1x256xi32>
    %7 = arith.cmpi ne, %5, %6 : vector<1x256xi32>
    %c0_i32_2 = arith.constant 0 : i32
    %8 = vector.broadcast %c0_i32_2 : i32 to vector<1x256xi32>
    %9 = arith.cmpi slt, %5, %8 : vector<1x256xi32>
    %c0_i32_3 = arith.constant 0 : i32
    %10 = arith.cmpi slt, %3, %c0_i32_3 : i32
    %11 = vector.broadcast %10 : i1 to vector<1x256xi1>
    %12 = vector.broadcast %11 : vector<1x256xi1> to vector<1x256xi1>
    %13 = arith.xori %9, %12 : vector<1x256xi1>
    %14 = arith.andi %13, %7 : vector<1x256xi1>
    %15 = vector.broadcast %3 : i32 to vector<1x256xi32>
    %16 = arith.addi %5, %15 : vector<1x256xi32>
    %17 = arith.select %14, %16, %5 : vector<1x256xi1>, vector<1x256xi32>
    %c16_i32_4 = arith.constant 16 : i32
    %18 = vector.broadcast %c16_i32_4 : i32 to vector<1x256xi32>
    %19 = arith.cmpi slt, %1, %18 : vector<1x256xi32>
    %c240_i32 = arith.constant 240 : i32
    %20 = vector.broadcast %c240_i32 : i32 to vector<1x256xi32>
    %21 = arith.cmpi sge, %1, %20 : vector<1x256xi32>
    %c0_i32_5 = arith.constant 0 : i32
    %22 = vector.broadcast %c0_i32_5 : i32 to vector<1x256xi32>
    %23 = arith.cmpi eq, %17, %22 : vector<1x256xi32>
    %c15_i32 = arith.constant 15 : i32
    %24 = vector.broadcast %c15_i32 : i32 to vector<1x256xi32>
    %25 = arith.cmpi eq, %17, %24 : vector<1x256xi32>
    %c16_i32_6 = arith.constant 16 : i32
    %26 = tpu.dynamic_rotate %0 by %c16_i32_6 dim 1 : vector<8x256xf32>, i32 -> vector<8x256xf32>
    %27 = vector.shape_cast %19 : vector<1x256xi1> to vector<1x256xi1>
    %28 = vector.broadcast %27 : vector<1x256xi1> to vector<8x256xi1>
    %29 = arith.select %28, %0, %26 : vector<8x256xi1>, vector<8x256xf32>
    %c240_i32_7 = arith.constant 240 : i32
    %30 = tpu.dynamic_rotate %0 by %c240_i32_7 dim 1 : vector<8x256xf32>, i32 -> vector<8x256xf32>
    %31 = vector.shape_cast %21 : vector<1x256xi1> to vector<1x256xi1>
    %32 = vector.broadcast %31 : vector<1x256xi1> to vector<8x256xi1>
    %33 = arith.select %32, %0, %30 : vector<8x256xi1>, vector<8x256xf32>
    %c1_i32_8 = arith.constant 1 : i32
    %34 = tpu.dynamic_rotate %29 by %c1_i32_8 dim 1 : vector<8x256xf32>, i32 -> vector<8x256xf32>
    %35 = vector.shape_cast %23 : vector<1x256xi1> to vector<1x256xi1>
    %36 = vector.broadcast %35 : vector<1x256xi1> to vector<8x256xi1>
    %37 = arith.select %36, %29, %34 : vector<8x256xi1>, vector<8x256xf32>
    %c255_i32 = arith.constant 255 : i32
    %38 = tpu.dynamic_rotate %29 by %c255_i32 dim 1 : vector<8x256xf32>, i32 -> vector<8x256xf32>
    %39 = vector.shape_cast %25 : vector<1x256xi1> to vector<1x256xi1>
    %40 = vector.broadcast %39 : vector<1x256xi1> to vector<8x256xi1>
    %41 = arith.select %40, %29, %38 : vector<8x256xi1>, vector<8x256xf32>
    %c1_i32_9 = arith.constant 1 : i32
    %42 = tpu.dynamic_rotate %0 by %c1_i32_9 dim 1 : vector<8x256xf32>, i32 -> vector<8x256xf32>
    %43 = vector.shape_cast %23 : vector<1x256xi1> to vector<1x256xi1>
    %44 = vector.broadcast %43 : vector<1x256xi1> to vector<8x256xi1>
    %45 = arith.select %44, %0, %42 : vector<8x256xi1>, vector<8x256xf32>
    %c255_i32_10 = arith.constant 255 : i32
    %46 = tpu.dynamic_rotate %0 by %c255_i32_10 dim 1 : vector<8x256xf32>, i32 -> vector<8x256xf32>
    %47 = vector.shape_cast %25 : vector<1x256xi1> to vector<1x256xi1>
    %48 = vector.broadcast %47 : vector<1x256xi1> to vector<8x256xi1>
    %49 = arith.select %48, %0, %46 : vector<8x256xi1>, vector<8x256xf32>
    %c1_i32_11 = arith.constant 1 : i32
    %50 = tpu.dynamic_rotate %33 by %c1_i32_11 dim 1 : vector<8x256xf32>, i32 -> vector<8x256xf32>
    %51 = vector.shape_cast %23 : vector<1x256xi1> to vector<1x256xi1>
    %52 = vector.broadcast %51 : vector<1x256xi1> to vector<8x256xi1>
    %53 = arith.select %52, %33, %50 : vector<8x256xi1>, vector<8x256xf32>
    %c255_i32_12 = arith.constant 255 : i32
    %54 = tpu.dynamic_rotate %33 by %c255_i32_12 dim 1 : vector<8x256xf32>, i32 -> vector<8x256xf32>
    %55 = vector.shape_cast %25 : vector<1x256xi1> to vector<1x256xi1>
    %56 = vector.broadcast %55 : vector<1x256xi1> to vector<8x256xi1>
    %57 = arith.select %56, %33, %54 : vector<8x256xi1>, vector<8x256xf32>
    %58 = tpu.concatenate %37, %29, %41, %45, %0, %49, %53, %33, %57 in 0 : vector<8x256xf32>, vector<8x256xf32>, vector<8x256xf32>, vector<8x256xf32>, vector<8x256xf32>, vector<8x256xf32>, vector<8x256xf32>, vector<8x256xf32>, vector<8x256xf32> -> vector<72x256xf32>
    %c0_13 = arith.constant 0 : index
    %c0_14 = arith.constant 0 : index
    %59 = vector.load %arg2[%c0_13, %c0_14] : memref<16x72xf32, #tpu.memory_space<vmem>>, vector<16x72xf32>
    %cst = arith.constant dense<0.000000e+00> : vector<16x256xf32>
    %60 = tpu.matmul %59, %58, %cst {dimension_numbers = #tpu.dot_dimension_numbers<[1], [0], [0], [1], [0, 0, 1, 1], [], []>} : vector<16x72xf32>, vector<72x256xf32>, vector<16x256xf32> -> vector<16x256xf32>
    %c0_15 = arith.constant 0 : index
    %c0_16 = arith.constant 0 : index
    %61 = vector.load %arg3[%c0_15, %c0_16] : memref<16x1xf32, #tpu.memory_space<vmem>>, vector<16x1xf32>
    %62 = vector.broadcast %61 : vector<16x1xf32> to vector<16x256xf32>
    %63 = arith.addf %60, %62 : vector<16x256xf32>
    %cst_17 = arith.constant 0.00999999977 : f32
    %64 = vector.broadcast %cst_17 : f32 to vector<16x256xf32>
    %65 = arith.mulf %64, %63 : vector<16x256xf32>
    %66 = arith.maximumf %63, %65 : vector<16x256xf32>
    %c0_18 = arith.constant 0 : index
    %c0_19 = arith.constant 0 : index
    %67 = vector.load %arg4[%c0_18, %c0_19] : memref<16x256xf32, #tpu.memory_space<vmem>>, vector<16x256xf32>
    tpu.vector_store %arg4[%c0_18, %c0_19], %66 {strides = array<i32>} : memref<16x256xf32, #tpu.memory_space<vmem>>, vector<16x256xf32>,
    return
  }
  func.func @transform_0(%arg0: i32) -> (i32, i32) {
    %c0_i32 = arith.constant 0 : i32
    %c0_i32_0 = arith.constant 0 : i32
    return %arg0, %c0_i32 : i32, i32
  }
  func.func @transform_1(%arg0: i32) -> (i32, i32) {
    %c0_i32 = arith.constant 0 : i32
    %c0_i32_0 = arith.constant 0 : i32
    %c0_i32_1 = arith.constant 0 : i32
    return %c0_i32, %c0_i32_0 : i32, i32
  }
  func.func @transform_2(%arg0: i32) -> (i32, i32) {
    %c0_i32 = arith.constant 0 : i32
    %c0_i32_0 = arith.constant 0 : i32
    %c0_i32_1 = arith.constant 0 : i32
    return %c0_i32, %c0_i32_0 : i32, i32
  }
  func.func @transform_3(%arg0: i32) -> (i32, i32) {
    %c0_i32 = arith.constant 0 : i32
    %c0_i32_0 = arith.constant 0 : i32
    return %arg0, %c0_i32 : i32, i32
  }
}

</mosaic_0001>

<llo_original>
// kernel: tpu_custom_call.1
$region0: #{tpu_custom_call.1}
  #allocation0 [shape = 'u32[]', space=smem, size = 0x4, offset = 0x4, fixed_abs, tag = 'smem constant byte address 0x4 - core index']
  #allocation1 [shape = 'u32[144,128]{1,0:T(1,128)}', space=vmem, size = 0x12000, scoped, tag = 'internal scratch']
  %s0 = inlined_call_operand.vmem [shape: f32[8,256], index: 0, kind: input, shape index: {}]
  %s1 = inlined_call_operand.hbm [shape: f32[16,72], index: 1, kind: input, shape index: {}]
  %s2 = inlined_call_operand.vmem [shape: f32[16,1], index: 2, kind: input, shape index: {}]
  %s3 = inlined_call_operand.hbm [shape: f32[16,256], index: 3, kind: output, shape index: {}]
  %s4 = sld [smem:[#allocation0]]
  $region26: #{tpu_custom_call.1} parent=0
    _
  %s6 = ssub.s32 1, %s4
  %s7 = scalar_select 0, %s6, %s4
  $region1: #{tpu_custom_call.1} parent=0
    #allocation2 [shape = 'u8[8192]{0}', space=vmem, size = 0x2000, scoped, tag = 'input window, operand 1, single buffered']
    #allocation3 [shape = 's32[1]{0}', space=sflag, size = 0x4, scoped, tag = 'scoped memory for tpu_custom_call.1']
    #allocation4 [shape = 's32[1]{0}', space=sflag, size = 0x4, scoped, tag = 'scoped memory for tpu_custom_call.1']
    #allocation5 [shape = 'u8[16384]{0}', space=vmem, size = 0x4000, scoped, tag = 'output window, operand 0, single buffered']
    %8 = vsyncpa [#allocation3], 0
    %9 = vsyncpa [#allocation4], 0
    // Predicated region
    $region2: #{tpu_custom_call.1} parent=1 // pred_check
      _
    $region3: #{tpu_custom_call.1} parent=1 // pred_check_branch
      %11 = sbr.rel (0) target = $region5
    $region4: #{tpu_custom_call.1} parent=1 // pred_region
      _
    $region5: #{tpu_custom_call.1} parent=1 // pred_fallthru
      _
    // Predicated region
    $region6: #{tpu_custom_call.1} parent=1 // pred_check
      _
    $region7: #{tpu_custom_call.1} parent=1 // pred_check_branch
      %13 = sbr.rel (0) target = $region9
    $region8: #{tpu_custom_call.1} parent=1 // pred_region
      %s15 = ssub.s32 256, 256
      %16 = vsyncadd [#allocation3], %s15
      %s17 = sshll.u32 [#allocation2], 4
      %s18 = int_to_ptr.vmem [resolvable:$true] %s17
      %23 = dma.hbm_to_vmem [thread:$0]  %s1, 256, %s18, [#allocation3], 128, 128, 8
    $region9: #{tpu_custom_call.1} parent=1 // pred_fallthru
      _
    // Predicated region
    $region10: #{tpu_custom_call.1} parent=1 // pred_check
      _
    $region11: #{tpu_custom_call.1} parent=1 // pred_check_branch
      %25 = sbr.rel (0) target = $region13
    $region12: #{tpu_custom_call.1} parent=1 // pred_region
      _
    $region13: #{tpu_custom_call.1} parent=1 // pred_fallthru
      _
    // Predicated region
    $region14: #{tpu_custom_call.1} parent=1 // pred_check
      _
    $region15: #{tpu_custom_call.1} parent=1 // pred_check_branch
      %27 = sbr.rel (0) target = $region17
    $region16: #{tpu_custom_call.1} parent=1 // pred_region
      %28 = dma.done [#allocation3], 256
    $region17: #{tpu_custom_call.1} parent=1 // pred_fallthru
      _
    %v29 = vld [vmem:[%s0] sm:$0xff]
    %v30 = vld [vmem:[%s0 + $0x8] sm:$0xff]
    %v31 = vlaneseq
    %v32 = vand.u32 %v31, 127
    %v33 = vadd.s32 %v32, 128
    %vm34 = vcmp.lt.s32.totalorder %v32, 0
    %v35 = vsub.s32 0, %v32
    %v36 = vsel %vm34, %v35, %v32
    %v37 = vshrl.u32 %v36, 4
    %v38 = vand.u32 %v36, 15
    %v39 = vsub.s32 0, %v38
    %v40 = vsel %vm34, %v39, %v38
    %vm41 = vcmp.lt.s32.totalorder %v33, 0
    %v42 = vsub.s32 0, %v33
    %v43 = vsel %vm41, %v42, %v33
    %v44 = vshrl.u32 %v43, 4
    %v45 = vand.u32 %v43, 15
    %v46 = vsub.s32 0, %v45
    %v47 = vsel %vm41, %v46, %v45
    %vm48 = vcmp.ne.s32.totalorder %v40, 0
    %vm49 = vcmp.ne.s32.totalorder %v47, 0
    %vm50 = vcmp.lt.s32.totalorder %v40, 0
    %vm51 = vcmp.lt.s32.totalorder %v47, 0
    %vm52 = vmand %vm50, %vm48
    %vm53 = vmand %vm51, %vm49
    %v54 = vadd.s32 %v40, 16
    %v55 = vadd.s32 %v47, 16
    %v56 = vsel %vm52, %v54, %v40
    %v57 = vsel %vm53, %v55, %v47
    %vm58 = vcmp.lt.s32.totalorder %v32, 16
    %vm59 = vcmp.lt.s32.totalorder %v33, 16
    %vm60 = vcmp.ge.s32.totalorder %v32, 240
    %vm61 = vcmp.ge.s32.totalorder %v33, 240
    %vm62 = vcmp.eq.s32.totalorder %v56, 0
    %vm63 = vcmp.eq.s32.totalorder %v57, 0
    %vm64 = vcmp.eq.s32.totalorder %v56, 15
    %vm65 = vcmp.eq.s32.totalorder %v57, 15
    %66 = vrot.lane.b32.xlu0 %v29, 16
    %v67 = vpop.permute.xlu0 %66
    %68 = vrot.lane.b32.xlu0 %v30, 16
    %v69 = vpop.permute.xlu0 %68
    %v70 = vsel %vm58, %v67, %v69
    %v71 = vsel %vm58, %v69, %v67
    %v72 = vsel %vm58, 1, 0
    %v73 = vsel %vm59, 1, 0
    %vm74 = vcmp.eq.s32.totalorder %v72, 1
    %vm75 = vcmp.eq.s32.totalorder %v73, 1
    %v76 = vsel %vm74, %v29, %v71
    %v77 = vsel %vm75, %v30, %v70
    %78 = vrot.lane.b32.xlu0 %v29, 112
    %v79 = vpop.permute.xlu0 %78
    %80 = vrot.lane.b32.xlu0 %v30, 112
    %v81 = vpop.permute.xlu0 %80
    %vm82 = vcmp.lt.s32.totalorder %v32, 112
    %v83 = vsel %vm82, %v79, %v81
    %v84 = vsel %vm82, %v81, %v79
    %v85 = vsel %vm60, 1, 0
    %v86 = vsel %vm61, 1, 0
    %vm87 = vcmp.eq.s32.totalorder %v85, 1
    %vm88 = vcmp.eq.s32.totalorder %v86, 1
    %v89 = vsel %vm87, %v29, %v83
    %v90 = vsel %vm88, %v30, %v84
    %91 = vrot.lane.b32.xlu0 %v76, 1
    %v92 = vpop.permute.xlu0 %91
    %93 = vrot.lane.b32.xlu0 %v77, 1
    %v94 = vpop.permute.xlu0 %93
    %vm95 = vcmp.lt.s32.totalorder %v32, 1
    %v96 = vsel %vm95, %v92, %v94
    %v97 = vsel %vm95, %v94, %v92
    %v98 = vsel %vm62, 1, 0
    %v99 = vsel %vm63, 1, 0
    %vm100 = vcmp.eq.s32.totalorder %v98, 1
    %vm101 = vcmp.eq.s32.totalorder %v99, 1
    %v102 = vsel %vm100, %v76, %v97
    %v103 = vsel %vm101, %v77, %v96
    %104 = vrot.lane.b32.xlu0 %v76, 127
    %v105 = vpop.permute.xlu0 %104
    %106 = vrot.lane.b32.xlu0 %v77, 127
    %v107 = vpop.permute.xlu0 %106
    %vm108 = vcmp.lt.s32.totalorder %v32, 127
    %v109 = vsel %vm108, %v105, %v107
    %v110 = vsel %vm108, %v107, %v105
    %v111 = vsel %vm64, 1, 0
    %v112 = vsel %vm65, 1, 0
    %vm113 = vcmp.eq.s32.totalorder %v111, 1
    %vm114 = vcmp.eq.s32.totalorder %v112, 1
    %v115 = vsel %vm113, %v76, %v109
    %v116 = vsel %vm114, %v77, %v110
    %117 = vrot.lane.b32.xlu0 %v29, 1
    %v118 = vpop.permute.xlu0 %117
    %119 = vrot.lane.b32.xlu0 %v30, 1
    %v120 = vpop.permute.xlu0 %119
    %v121 = vsel %vm95, %v118, %v120
    %v122 = vsel %vm95, %v120, %v118
    %v123 = vsel %vm100, %v29, %v122
    %v124 = vsel %vm101, %v30, %v121
    %125 = vrot.lane.b32.xlu0 %v29, 127
    %v126 = vpop.permute.xlu0 %125
    %127 = vrot.lane.b32.xlu0 %v30, 127
    %v128 = vpop.permute.xlu0 %127
    %v129 = vsel %vm108, %v126, %v128
    %v130 = vsel %vm108, %v128, %v126
    %v131 = vsel %vm113, %v29, %v129
    %v132 = vsel %vm114, %v30, %v130
    %133 = vrot.lane.b32.xlu0 %v89, 1
    %v134 = vpop.permute.xlu0 %133
    %135 = vrot.lane.b32.xlu0 %v90, 1
    %v136 = vpop.permute.xlu0 %135
    %v137 = vsel %vm95, %v134, %v136
    %v138 = vsel %vm95, %v136, %v134
    %v139 = vsel %vm100, %v89, %v138
    %v140 = vsel %vm101, %v90, %v137
    %141 = vrot.lane.b32.xlu0 %v89, 127
    %v142 = vpop.permute.xlu0 %141
    %143 = vrot.lane.b32.xlu0 %v90, 127
    %v144 = vpop.permute.xlu0 %143
    %v145 = vsel %vm108, %v142, %v144
    %v146 = vsel %vm108, %v144, %v142
    %v147 = vsel %vm113, %v89, %v145
    %v148 = vsel %vm114, %v90, %v146
    %v149 = vld [vmem:[#allocation2] sm:$0xff]
    %v150 = vld [vmem:[#allocation2 + $0x8] sm:$0xff]
    %v151 = vld [vmem:[%s2] sm:$0xff]
    %v152 = vld [vmem:[%s2 + $0x8] sm:$0xff]
    %154 = vset.pattern.permute.xlu0 0
    %155 = vperm.xlu0 %154, %v151
    %v156 = vpop.permute.xlu0 %155
    %159 = vset.pattern.permute.xlu0 0
    %160 = vperm.xlu0 %159, %v152
    %v161 = vpop.permute.xlu0 %160
    %vm163 = vcmask 588800
    %v165 = vsel %vm163, %v149, 0
    %v168 = vsel %vm163, %v150, 0
    %170 = vmatprep.subr.mxu0 %v103
    %171 = vmatpush1.msra.mxu0 %v102
    %172 = vmatprep.subr.mxu0 %v77
    %173 = vmatpush1.msra.mxu0 %v76
    %174 = vmatprep.subr.mxu0 %v116
    %175 = vmatpush1.msra.mxu0 %v115
    %176 = vmatprep.subr.mxu0 %v124
    %177 = vmatpush1.msra.mxu0 %v123
    %178 = vmatprep.subr.mxu0 %v30
    %179 = vmatpush1.msra.mxu0 %v29
    %180 = vmatprep.subr.mxu0 %v132
    %181 = vmatpush1.msra.mxu0 %v131
    %182 = vmatprep.subr.mxu0 %v140
    %183 = vmatpush1.msra.mxu0 %v139
    %184 = vmatprep.subr.mxu0 %v90
    %185 = vmatpush1.msra.mxu0 %v89
    %186 = vmatprep.subr.mxu0 %v148
    %187 = vmatpush1.msra.mxu0 %v147
    %188 = vmatprep.subr.mxu0 0.0
    %189 = vmatpush1.msra.mxu0 0.0
    %190 = vmatprep.subr.mxu0 0.0
    %191 = vmatpush1.msra.mxu0 0.0
    %192 = vmatprep.subr.mxu0 0.0
    %193 = vmatpush1.msra.mxu0 0.0
    %194 = vmatprep.subr.mxu0 0.0
    %195 = vmatpush1.msra.mxu0 0.0
    %196 = vmatprep.subr.mxu0 0.0
    %197 = vmatpush1.msra.mxu0 0.0
    %198 = vmatprep.subr.mxu0 0.0
    %199 = vmatpush1.msra.mxu0 0.0
    %200 = vmatprep.subr.mxu0 0.0
    %201 = vmatpush1.msra.mxu0 0.0
    %202 = vmatprep.subr.mxu0 0.0
    %203 = vmatpush1.msra.mxu0 0.0
    %204 = vmatprep.subr.mxu0 0.0
    %205 = vmatpush1.msra.mxu0 0.0
    %206 = vmatprep.subr.mxu0 0.0
    %207 = vmatpush1.msra.mxu0 0.0
    %208 = vmatprep.subr.mxu0 0.0
    %209 = vmatpush1.msra.mxu0 0.0
    %210 = vmatprep.subr.mxu0 0.0
    %211 = vmatpush1.msra.mxu0 0.0
    %212 = vmatprep.subr.mxu0 0.0
    %213 = vmatpush1.msra.mxu0 0.0
    %214 = vmatprep.subr.mxu0 0.0
    %215 = vmatpush1.msra.mxu0 0.0
    %216 = vmatprep.subr.mxu0 0.0
    %217 = vmatpush1.msra.mxu0 0.0
    %218 = vmatprep.subr.mxu0 0.0
    %219 = vmatpush1.msra.mxu0 0.0
    %220 = vmatprep.subr.mxu0 0.0
    %221 = vmatpush1.msra.mxu0 0.0
    %222 = vmatprep.subr.mxu0 0.0
    %223 = vmatpush1.msra.mxu0 0.0
    %224 = vmatprep.subr.mxu0 0.0
    %225 = vmatpush1.msra.mxu0 0.0
    %226 = vmatprep.subr.mxu0 0.0
    %227 = vmatpush1.msra.mxu0 0.0
    %228 = vmatprep.subr.mxu0 0.0
    %229 = vmatpush1.msra.mxu0 0.0
    %230 = vmatprep.subr.mxu0 0.0
    %231 = vmatpush1.msra.mxu0 0.0
    %232 = vmatprep.subr.mxu0 0.0
    %233 = vmatpush1.msra.mxu0 0.0
    %234 = vmatprep.mubr.f32.mxu0 0.0
    %235 = vmatmul.mubr.f32.gmra.mrb[0].mxu0 %v165
    %v236 = vpop.f32.mrb[0].mxu0
    %v237 = vadd.f32 %v156, %v236
    %v238 = vpop.f32.mrb[0].mxu0
    %v239 = vadd.f32 %v156, %v238
    %240 = vmatprep.mubr.f32.mxu0 0.0
    %241 = vmatmul.mubr.f32.gmra.mrb[0].mxu0 %v168
    %v242 = vpop.f32.mrb[0].mxu0
    %v243 = vadd.f32 %v161, %v242
    %v244 = vpop.f32.mrb[0].mxu0
    %v245 = vadd.f32 %v161, %v244
    %246 = vdwg.mxu0
    %v247 = vmul.f32 %v237, 0.01
    %v248 = vmul.f32 %v239, 0.01
    %v249 = vmul.f32 %v243, 0.01
    %v250 = vmul.f32 %v245, 0.01
    %v251 = vmax.f32 %v237, %v247
    %v252 = vmax.f32 %v239, %v248
    %v253 = vmax.f32 %v243, %v249
    %v254 = vmax.f32 %v245, %v250
    %255 = vst [vmem:[#allocation5] sm:$0xff] %v251
    %256 = vst [vmem:[#allocation5 + $0x8] sm:$0xff] %v252
    %257 = vst [vmem:[#allocation5 + $0x10] sm:$0xff] %v253
    %258 = vst [vmem:[#allocation5 + $0x18] sm:$0xff] %v254
    // Predicated region
    $region18: #{tpu_custom_call.1} parent=1 // pred_check
      _
    $region19: #{tpu_custom_call.1} parent=1 // pred_check_branch
      %260 = sbr.rel (0) target = $region21
    $region20: #{tpu_custom_call.1} parent=1 // pred_region
      %s262 = ssub.s32 512, 512
      %263 = vsyncadd [#allocation4], %s262
      %s264 = sshll.u32 [#allocation5], 4
      %s265 = int_to_ptr.vmem [resolvable:$true] %s264
      %270 = dma.vmem_to_hbm [thread:$0]  %s265, 512, %s3, [#allocation4], 256, 256, 16
    $region21: #{tpu_custom_call.1} parent=1 // pred_fallthru
      _
    // Predicated region
    $region22: #{tpu_custom_call.1} parent=1 // pred_check
      _
    $region23: #{tpu_custom_call.1} parent=1 // pred_check_branch
      %272 = sbr.rel (0) target = $region25
    $region24: #{tpu_custom_call.1} parent=1 // pred_region
      %273 = dma.done [#allocation4], 512
    $region25: #{tpu_custom_call.1} parent=1 // pred_fallthru
      _
    %274 = vsyncpa [#allocation3], 1
    %275 = vsyncpa [#allocation4], 1

</llo_original>
